<compile_context>
chip_gen: v7x
topology: tpu7x:2x2x1
jax: 0.10.0
libtpu: 0.0.40
codegen_flags: <defaults>
</compile_context>

<pallas_src>
import jax
import jax.numpy as jnp
from jax.experimental import pallas as pl
from jax.experimental.pallas import tpu as pltpu


def _gaussian_smearing_kernel(coeff_ref, dist_ref, offset_ref, out_ref):
    # coeff_ref  : scalar-prefetch SMEM ref, shape (1,)
    # dist_ref   : (1, tn) tile of distances (N on lanes)
    # offset_ref : (G_pad, 1) full offset column (G on sublanes)
    # out_ref    : (G_pad, tn) lane-dense output tile
    d = dist_ref[...]                       # (1, tn)
    off = offset_ref[...]                   # (G_pad, 1)
    coeff = coeff_ref[0]                    # scalar
    diff = d - off                          # (G_pad, tn) via broadcast (VPU)
    out_ref[...] = jnp.exp(coeff * diff * diff)


def gaussian_smearing_pallas(distances, offset, coeff, *, tn=8192):
    """Pallas forward of GaussianSmearing.

    distances: float32 array of arbitrary shape
    offset:    float32 (G,)
    coeff:     float32 scalar
    returns:   float32 (*distances.shape, G)
    """
    orig_shape = distances.shape
    G = offset.shape[0]

    d_flat = distances.reshape(-1).astype(jnp.float32)
    N = d_flat.shape[0]

    # Lane tile: large (amortizes ~0.35us/grid-step overhead) but never far
    # bigger than the input itself.  Must be a multiple of 128 lanes.
    tn = max(128, min(int(tn), pl.cdiv(N, 128) * 128))
    n_pad = pl.cdiv(N, tn) * tn
    g_pad = pl.cdiv(G, 8) * 8               # sublane-aligned Gaussian count

    d_row = jnp.pad(d_flat, (0, n_pad - N)).reshape(1, n_pad)
    off_col = jnp.pad(offset.astype(jnp.float32), (0, g_pad - G)).reshape(g_pad, 1)
    coeff_arr = jnp.asarray(coeff, jnp.float32).reshape(1)

    out_gn = pl.pallas_call(
        _gaussian_smearing_kernel,
        out_shape=jax.ShapeDtypeStruct((g_pad, n_pad), jnp.float32),
        grid_spec=pltpu.PrefetchScalarGridSpec(
            num_scalar_prefetch=1,
            grid=(n_pad // tn,),
            in_specs=[
                # (1, tn): sublane dim equals full array dim (1); lane dim
                # is a multiple of 128.
                pl.BlockSpec((1, tn), lambda i, c: (0, i)),
                # Full offset column resident every step.
                pl.BlockSpec((g_pad, 1), lambda i, c: (0, 0)),
            ],
            out_specs=pl.BlockSpec((g_pad, tn), lambda i, c: (0, i)),
        ),
        compiler_params=pltpu.CompilerParams(
            # Single grid axis is parallel -> shards across both v7x
            # TensorCores when n_pad // tn >= 2; neutral on v5e/v6e.
            dimension_semantics=("parallel",),
        ),
    )(coeff_arr, d_row, off_col)

    # Layout plumbing back to torch semantics: (*distances.shape, G).
    return out_gn[:G, :N].T.reshape(*orig_shape, G)


def make_gaussian_smearing_params(start=0.0, stop=5.0, num_gaussians=50):
    """Deterministic parameter init matching the PyTorch __init__."""
    offset = jnp.linspace(start, stop, num_gaussians, dtype=jnp.float32)
    coeff = jnp.float32(-0.5 / float(offset[1] - offset[0]) ** 2)
    return offset, coeff


if __name__ == "__main__":
    start, stop, num_gaussians = 0.0, 5.0, 50
    offset, coeff = make_gaussian_smearing_params(start, stop, num_gaussians)

    # Small example input: a (2, 128) batch of interatomic distances in [0, 5).
    key = jax.random.PRNGKey(0)
    distances = jax.random.uniform(
        key, (2, 128), dtype=jnp.float32, minval=0.0, maxval=5.0
    )

    out = gaussian_smearing_pallas(distances, offset, coeff)
    out = jax.block_until_ready(out)

    # Pure-JAX reference of the torch forward.
    ref = jnp.exp(coeff * (distances[..., None] - offset) ** 2)

    assert out.shape == (2, 128, num_gaussians), out.shape
    assert out.dtype == jnp.float32
    assert jnp.allclose(out, ref, atol=1e-6, rtol=1e-6), float(
        jnp.max(jnp.abs(out - ref))
    )

    print("KERNEL_OK")
</pallas_src>

<mosaic_0001>
module attributes {stable_mosaic.version = 11 : i64} {
  func.func @_gaussian_smearing_kernel(%arg0: i32, %arg1: memref<1xf32, #tpu.memory_space<smem>>, %arg2: memref<1x256xf32, #tpu.memory_space<vmem>>, %arg3: memref<56x1xf32, #tpu.memory_space<vmem>>, %arg4: memref<56x256xf32, #tpu.memory_space<vmem>>) attributes {dimension_semantics = [#tpu.dimension_semantics<parallel>], iteration_bounds = array<i64: 1>, scalar_prefetch = 1 : i64, scratch_operands = 0 : i64, tpu.core_type = #tpu.core_type<tc>, window_params = [{transform_indices = @transform_0, window_bounds = array<i64: 1, 256>}, {pipeline_mode = #tpu.pipeline_mode<synchronous>, transform_indices = @transform_1, window_bounds = array<i64: 56, 1>}, {transform_indices = @transform_2, window_bounds = array<i64: 56, 256>}]} {
    %c0 = arith.constant 0 : index
    %c0_0 = arith.constant 0 : index
    %0 = vector.load %arg2[%c0, %c0_0] : memref<1x256xf32, #tpu.memory_space<vmem>>, vector<1x256xf32>
    %c0_1 = arith.constant 0 : index
    %c0_2 = arith.constant 0 : index
    %1 = vector.load %arg3[%c0_1, %c0_2] : memref<56x1xf32, #tpu.memory_space<vmem>>, vector<56x1xf32>
    %c0_3 = arith.constant 0 : index
    %2 = memref.load %arg1[%c0_3] : memref<1xf32, #tpu.memory_space<smem>>
    %3 = vector.broadcast %0 : vector<1x256xf32> to vector<56x256xf32>
    %4 = vector.broadcast %1 : vector<56x1xf32> to vector<56x256xf32>
    %5 = arith.subf %3, %4 : vector<56x256xf32>
    %6 = vector.broadcast %2 : f32 to vector<56x256xf32>
    %7 = arith.mulf %6, %5 : vector<56x256xf32>
    %8 = arith.mulf %7, %5 : vector<56x256xf32>
    %9 = math.exp %8 : vector<56x256xf32>
    %c0_4 = arith.constant 0 : index
    %c0_5 = arith.constant 0 : index
    %10 = vector.load %arg4[%c0_4, %c0_5] : memref<56x256xf32, #tpu.memory_space<vmem>>, vector<56x256xf32>
    tpu.vector_store %arg4[%c0_4, %c0_5], %9 {strides = array<i32>} : memref<56x256xf32, #tpu.memory_space<vmem>>, vector<56x256xf32>,
    return
  }
  func.func @transform_0(%arg0: i32, %arg1: memref<1xf32, #tpu.memory_space<smem>>) -> (i32, i32) {
    %c0_i32 = arith.constant 0 : i32
    %c0_i32_0 = arith.constant 0 : i32
    return %c0_i32, %arg0 : i32, i32
  }
  func.func @transform_1(%arg0: i32, %arg1: memref<1xf32, #tpu.memory_space<smem>>) -> (i32, i32) {
    %c0_i32 = arith.constant 0 : i32
    %c0_i32_0 = arith.constant 0 : i32
    %c0_i32_1 = arith.constant 0 : i32
    return %c0_i32, %c0_i32_0 : i32, i32
  }
  func.func @transform_2(%arg0: i32, %arg1: memref<1xf32, #tpu.memory_space<smem>>) -> (i32, i32) {
    %c0_i32 = arith.constant 0 : i32
    %c0_i32_0 = arith.constant 0 : i32
    return %c0_i32, %arg0 : i32, i32
  }
}

</mosaic_0001>

<llo_original>
// kernel: tpu_custom_call.1
$region0: #{tpu_custom_call.1}
  #allocation0 [shape = 'u32[]', space=smem, size = 0x4, offset = 0x4, fixed_abs, tag = 'smem constant byte address 0x4 - core index']
  #allocation1 [shape = 'u32[144,128]{1,0:T(1,128)}', space=vmem, size = 0x12000, scoped, tag = 'internal scratch']
  #allocation2 [shape = 's32[1]{0}', space=sflag, size = 0x4, scoped, tag = 'scoped memory for tpu_custom_call.1']
  #allocation3 [shape = 'f32[1]{0:T(128)S(6)}', space=smem, size = 0x200, scoped, tag = 'prefetched SMEM operand 0']
  %s0 = inlined_call_operand.<no memory space> [shape: f32[1], index: 0, kind: input, shape index: {}]
  %s1 = inlined_call_operand.vmem [shape: f32[1,256], index: 1, kind: input, shape index: {}]
  %s2 = inlined_call_operand.vmem [shape: f32[56,1], index: 2, kind: input, shape index: {}]
  %s3 = inlined_call_operand.hbm [shape: f32[56,256], index: 3, kind: output, shape index: {}]
  %s4 = sld [smem:[#allocation0]]
  $region18: #{tpu_custom_call.1} parent=0
    _
  %s6 = ssub.s32 1, %s4
  %s7 = scalar_select 0, %s6, %s4
  %8 = sst [smem:[#allocation3]] %s0
  $region1: #{tpu_custom_call.1} parent=0
    #allocation4 [shape = 'u8[57344]{0}', space=vmem, size = 0xe000, scoped, tag = 'output window, operand 0, single buffered']
    #allocation5 [shape = 's32[1]{0}', space=sflag, size = 0x4, scoped, tag = 'scoped memory for tpu_custom_call.1']
    %9 = vsyncpa [#allocation5], 0
    // Predicated region
    $region2: #{tpu_custom_call.1} parent=1 // pred_check
      _
    $region3: #{tpu_custom_call.1} parent=1 // pred_check_branch
      %11 = sbr.rel (0) target = $region5
    $region4: #{tpu_custom_call.1} parent=1 // pred_region
      _
    $region5: #{tpu_custom_call.1} parent=1 // pred_fallthru
      _
    // Predicated region
    $region6: #{tpu_custom_call.1} parent=1 // pred_check
      _
    $region7: #{tpu_custom_call.1} parent=1 // pred_check_branch
      %13 = sbr.rel (0) target = $region9
    $region8: #{tpu_custom_call.1} parent=1 // pred_region
      _
    $region9: #{tpu_custom_call.1} parent=1 // pred_fallthru
      _
    %v14 = vld [vmem:[%s1] sm:$0x3]
    %v15 = vld [vmem:[%s2] sm:$0xff]
    %v16 = vld [vmem:[%s2 + $0x8] sm:$0xff]
    %v17 = vld [vmem:[%s2 + $0x10] sm:$0xff]
    %v18 = vld [vmem:[%s2 + $0x18] sm:$0xff]
    %v19 = vld [vmem:[%s2 + $0x20] sm:$0xff]
    %v20 = vld [vmem:[%s2 + $0x28] sm:$0xff]
    %v21 = vld [vmem:[%s2 + $0x30] sm:$0xff]
    %s22 = sld [smem:[#allocation3]]
    %v24 = vlaneseq
    %v25 = vshrl.u32 %v24, 7
    %v26 = vsub.s32 0, %v25
    %v27 = vrot.slane %v14, %v26
    %v28 = vlaneseq
    %v29 = vshrl.u32 %v28, 7
    %v30 = vsub.s32 1, %v29
    %v31 = vrot.slane %v14, %v30
    %35 = vset.pattern.permute.xlu0 0
    %36 = vperm.xlu0 %35, %v15
    %v37 = vpop.permute.xlu0 %36
    %40 = vset.pattern.permute.xlu0 0
    %41 = vperm.xlu0 %40, %v16
    %v42 = vpop.permute.xlu0 %41
    %45 = vset.pattern.permute.xlu0 0
    %46 = vperm.xlu0 %45, %v17
    %v47 = vpop.permute.xlu0 %46
    %50 = vset.pattern.permute.xlu0 0
    %51 = vperm.xlu0 %50, %v18
    %v52 = vpop.permute.xlu0 %51
    %55 = vset.pattern.permute.xlu0 0
    %56 = vperm.xlu0 %55, %v19
    %v57 = vpop.permute.xlu0 %56
    %60 = vset.pattern.permute.xlu0 0
    %61 = vperm.xlu0 %60, %v20
    %v62 = vpop.permute.xlu0 %61
    %65 = vset.pattern.permute.xlu0 0
    %66 = vperm.xlu0 %65, %v21
    %v67 = vpop.permute.xlu0 %66
    %v69 = vsub.f32 %v27, %v37
    %v70 = vsub.f32 %v31, %v37
    %v71 = vsub.f32 %v27, %v42
    %v72 = vsub.f32 %v31, %v42
    %v73 = vsub.f32 %v27, %v47
    %v74 = vsub.f32 %v31, %v47
    %v75 = vsub.f32 %v27, %v52
    %v76 = vsub.f32 %v31, %v52
    %v77 = vsub.f32 %v27, %v57
    %v78 = vsub.f32 %v31, %v57
    %v79 = vsub.f32 %v27, %v62
    %v80 = vsub.f32 %v31, %v62
    %v81 = vsub.f32 %v27, %v67
    %v82 = vsub.f32 %v31, %v67
    %v83 = vstv %s22
    %v84 = vmul.f32 %v83, %v69
    %v85 = vmul.f32 %v83, %v70
    %v86 = vmul.f32 %v83, %v71
    %v87 = vmul.f32 %v83, %v72
    %v88 = vmul.f32 %v83, %v73
    %v89 = vmul.f32 %v83, %v74
    %v90 = vmul.f32 %v83, %v75
    %v91 = vmul.f32 %v83, %v76
    %v92 = vmul.f32 %v83, %v77
    %v93 = vmul.f32 %v83, %v78
    %v94 = vmul.f32 %v83, %v79
    %v95 = vmul.f32 %v83, %v80
    %v96 = vmul.f32 %v83, %v81
    %v97 = vmul.f32 %v83, %v82
    %v98 = vmul.f32 %v84, %v69
    %v99 = vmul.f32 %v85, %v70
    %v100 = vmul.f32 %v86, %v71
    %v101 = vmul.f32 %v87, %v72
    %v102 = vmul.f32 %v88, %v73
    %v103 = vmul.f32 %v89, %v74
    %v104 = vmul.f32 %v90, %v75
    %v105 = vmul.f32 %v91, %v76
    %v106 = vmul.f32 %v92, %v77
    %v107 = vmul.f32 %v93, %v78
    %v108 = vmul.f32 %v94, %v79
    %v109 = vmul.f32 %v95, %v80
    %v110 = vmul.f32 %v96, %v81
    %v111 = vmul.f32 %v97, %v82
    %v112 = vmul.f32 %v98, 1.442695
    %v113 = vpow.pop %v112
    %v114 = vmul.f32 %v99, 1.442695
    %v115 = vpow.pop %v114
    %v116 = vmul.f32 %v100, 1.442695
    %v117 = vpow.pop %v116
    %v118 = vmul.f32 %v101, 1.442695
    %v119 = vpow.pop %v118
    %v120 = vmul.f32 %v102, 1.442695
    %v121 = vpow.pop %v120
    %v122 = vmul.f32 %v103, 1.442695
    %v123 = vpow.pop %v122
    %v124 = vmul.f32 %v104, 1.442695
    %v125 = vpow.pop %v124
    %v126 = vmul.f32 %v105, 1.442695
    %v127 = vpow.pop %v126
    %v128 = vmul.f32 %v106, 1.442695
    %v129 = vpow.pop %v128
    %v130 = vmul.f32 %v107, 1.442695
    %v131 = vpow.pop %v130
    %v132 = vmul.f32 %v108, 1.442695
    %v133 = vpow.pop %v132
    %v134 = vmul.f32 %v109, 1.442695
    %v135 = vpow.pop %v134
    %v136 = vmul.f32 %v110, 1.442695
    %v137 = vpow.pop %v136
    %v138 = vmul.f32 %v111, 1.442695
    %v139 = vpow.pop %v138
    %140 = vst [vmem:[#allocation4] sm:$0xff] %v113
    %141 = vst [vmem:[#allocation4 + $0x8] sm:$0xff] %v115
    %142 = vst [vmem:[#allocation4 + $0x10] sm:$0xff] %v117
    %143 = vst [vmem:[#allocation4 + $0x18] sm:$0xff] %v119
    %144 = vst [vmem:[#allocation4 + $0x20] sm:$0xff] %v121
    %145 = vst [vmem:[#allocation4 + $0x28] sm:$0xff] %v123
    %146 = vst [vmem:[#allocation4 + $0x30] sm:$0xff] %v125
    %147 = vst [vmem:[#allocation4 + $0x38] sm:$0xff] %v127
    %148 = vst [vmem:[#allocation4 + $0x40] sm:$0xff] %v129
    %149 = vst [vmem:[#allocation4 + $0x48] sm:$0xff] %v131
    %150 = vst [vmem:[#allocation4 + $0x50] sm:$0xff] %v133
    %151 = vst [vmem:[#allocation4 + $0x58] sm:$0xff] %v135
    %152 = vst [vmem:[#allocation4 + $0x60] sm:$0xff] %v137
    %153 = vst [vmem:[#allocation4 + $0x68] sm:$0xff] %v139
    // Predicated region
    $region10: #{tpu_custom_call.1} parent=1 // pred_check
      _
    $region11: #{tpu_custom_call.1} parent=1 // pred_check_branch
      %155 = sbr.rel (0) target = $region13
    $region12: #{tpu_custom_call.1} parent=1 // pred_region
      %s157 = ssub.s32 1792, 1792
      %158 = vsyncadd [#allocation5], %s157
      %s159 = sshll.u32 [#allocation4], 4
      %s160 = int_to_ptr.vmem [resolvable:$true] %s159
      %165 = dma.vmem_to_hbm [thread:$0]  %s160, 1792, %s3, [#allocation5], 256, 256, 16
    $region13: #{tpu_custom_call.1} parent=1 // pred_fallthru
      _
    // Predicated region
    $region14: #{tpu_custom_call.1} parent=1 // pred_check
      _
    $region15: #{tpu_custom_call.1} parent=1 // pred_check_branch
      %167 = sbr.rel (0) target = $region17
    $region16: #{tpu_custom_call.1} parent=1 // pred_region
      %168 = dma.done [#allocation5], 1792
    $region17: #{tpu_custom_call.1} parent=1 // pred_fallthru
      _
    %169 = vsyncpa [#allocation5], 1

</llo_original>
